<compile_context>
chip_gen: v7x
topology: tpu7x:2x2x1
jax: 0.10.0
libtpu: 0.0.40
codegen_flags: <defaults>
</compile_context>

<pallas_src>
import functools

import jax
import jax.numpy as jnp
from jax.experimental import pallas as pl
from jax.experimental.pallas import tpu as pltpu


def gem_kernel(p_ref, x_ref, o_ref, *, eps, transpose_small_hw):
    # p is the learned scalar parameter, held in SMEM.
    p = p_ref[0, 0]
    inv_p = 1.0 / p

    x = x_ref[...]  # (TM, HW) block, natural layout

    if transpose_small_hw:
        # Tiny spatial maps (HW < 128): move the big TM axis onto lanes so the
        # clamp/log/exp chain uses all 128 lanes.  In-VMEM transpose only
        # (XLU slot); no extra HBM traffic.
        xt = jnp.transpose(x)                                   # (HW, TM)
        xc = jnp.maximum(xt.astype(jnp.float32), eps)
        xp = jnp.exp(p * jnp.log(xc))                           # x > 0 after clamp
        m = jnp.mean(xp, axis=0, keepdims=True)                 # (1, TM)
        y = jnp.exp(jnp.log(m) * inv_p)                         # (1, TM)
        o_ref[...] = jnp.transpose(y).astype(o_ref.dtype)       # (TM, 1)
    else:
        # clamp(min=eps) then x**p; x > 0 after the clamp, so exp(p*log(x))
        # is exact.  Elementwise chain runs lane-dense (HW >= 128).
        xc = jnp.maximum(x.astype(jnp.float32), eps)
        xp = jnp.exp(p * jnp.log(xc))
        # Mean over the full spatial extent (avg_pool2d with kernel == (H, W)).
        # Spatial axis sits on lanes -> cross-lane reduce (XLU slot).
        m = jnp.mean(xp, axis=-1, keepdims=True)                # (TM, 1)
        o_ref[...] = jnp.exp(jnp.log(m) * inv_p).astype(o_ref.dtype)


def gem_pallas(x, p, eps=1e-6):
    """GeM pooling. x: (N, C, H, W) float array, p: scalar parameter."""
    N, C, H, W = x.shape
    NC, HW = N * C, H * W

    # Natural layout: (NC, HW) is a free reshape of contiguous NCHW.
    x2 = x.reshape(NC, HW)
    p_arr = jnp.asarray(p, jnp.float32).reshape(1, 1)

    # --- dtype-aware tile sizing -------------------------------------------
    itemsize = jnp.dtype(x.dtype).itemsize
    hw_lanes = ((HW + 127) // 128) * 128          # lane-padded row length
    # Per row of a (TM, HW) tile:
    #   2x double-buffered input rows + ~2 f32 temporary rows (upcast x, x**p)
    per_row_bytes = 2 * hw_lanes * itemsize + 2 * hw_lanes * 4
    budget_bytes = 10 * 1024 * 1024               # fits v5e's 16 MiB scoped VMEM
    TM = max(8, (budget_bytes // per_row_bytes) // 8 * 8)

    # Keep >= 2 parallel grid steps when NC is large enough so both v7x
    # TensorCores get work (and pipelining has something to overlap).
    if NC > 128:
        half = ((pl.cdiv(NC, 2) + 7) // 8) * 8
        TM = min(TM, half)

    if NC <= TM:
        TM = NC                                   # single tile, full dim
    grid = (pl.cdiv(NC, TM),)

    kernel = functools.partial(
        gem_kernel, eps=float(eps), transpose_small_hw=(HW < 128)
    )

    out = pl.pallas_call(
        kernel,
        out_shape=jax.ShapeDtypeStruct((NC, 1), x.dtype),
        grid=grid,
        in_specs=[
            # scalar parameter p -> SMEM (whole array, untiled)
            pl.BlockSpec(memory_space=pltpu.MemorySpace.SMEM),
            # natural-layout input tiles (TM, HW), contiguous DMA per tile,
            # pipelined along the N*C axis
            pl.BlockSpec((TM, HW), lambda i: (i, 0)),
        ],
        out_specs=pl.BlockSpec((TM, 1), lambda i: (i, 0)),
        compiler_params=pltpu.CompilerParams(
            # N*C tiles are independent -> shard across TCs on v7x.
            dimension_semantics=("parallel",),
        ),
    )(p_arr, x2)

    return out.reshape(N, C, 1, 1)


def gem_reference(x, p, eps=1e-6):
    xc = jnp.maximum(x.astype(jnp.float32), eps)
    m = jnp.mean(xc ** p, axis=(-2, -1), keepdims=True)
    return (m ** (1.0 / p)).astype(x.dtype)


if __name__ == "__main__":
    key = jax.random.PRNGKey(0)
    N, C, H, W = 2, 4, 16, 16
    x = jax.random.normal(key, (N, C, H, W), dtype=jnp.float32)

    # nn.Parameter(torch.ones(1) * 3) -> deterministic init p = 3.0
    p = jnp.float32(3.0)
    eps = 1e-6

    y = gem_pallas(x, p, eps)
    y = jax.block_until_ready(y)

    y_ref = gem_reference(x, p, eps)
    assert y.shape == (N, C, 1, 1)
    assert jnp.allclose(y, y_ref, rtol=1e-4, atol=1e-5), (
        f"max abs err {jnp.max(jnp.abs(y - y_ref))}"
    )

    print("KERNEL_OK")
</pallas_src>

<mosaic_0001>
module attributes {stable_mosaic.version = 11 : i64} {
  func.func @gem_kernel(%arg0: i32, %arg1: memref<1x1xf32, #tpu.memory_space<smem>>, %arg2: memref<8x256xf32, #tpu.memory_space<vmem>>, %arg3: memref<8x1xf32, #tpu.memory_space<vmem>>) attributes {dimension_semantics = [#tpu.dimension_semantics<parallel>], iteration_bounds = array<i64: 1>, scalar_prefetch = 0 : i64, scratch_operands = 0 : i64, tpu.core_type = #tpu.core_type<tc>, window_params = [{transform_indices = @transform_0, window_bounds = array<i64: 1, 1>}, {transform_indices = @transform_1, window_bounds = array<i64: 8, 256>}, {transform_indices = @transform_2, window_bounds = array<i64: 8, 1>}]} {
    %c0 = arith.constant 0 : index
    %c0_0 = arith.constant 0 : index
    %0 = memref.load %arg1[%c0, %c0_0] : memref<1x1xf32, #tpu.memory_space<smem>>
    %cst = arith.constant 1.000000e+00 : f32
    %1 = arith.divf %cst, %0 : f32
    %c0_1 = arith.constant 0 : index
    %c0_2 = arith.constant 0 : index
    %2 = vector.load %arg2[%c0_1, %c0_2] : memref<8x256xf32, #tpu.memory_space<vmem>>, vector<8x256xf32>
    %cst_3 = arith.constant 9.99999997E-7 : f32
    %3 = vector.broadcast %cst_3 : f32 to vector<8x256xf32>
    %4 = arith.maximumf %2, %3 : vector<8x256xf32>
    %5 = math.log %4 : vector<8x256xf32>
    %6 = vector.broadcast %0 : f32 to vector<8x256xf32>
    %7 = arith.mulf %6, %5 : vector<8x256xf32>
    %8 = math.exp %7 : vector<8x256xf32>
    %cst_4 = arith.constant dense<0.000000e+00> : vector<8xf32>
    %9 = vector.multi_reduction <add>, %8, %cst_4 [1] : vector<8x256xf32> to vector<8xf32>
    %10 = vector.shape_cast %9 : vector<8xf32> to vector<8x1xf32>
    %cst_5 = arith.constant 2.560000e+02 : f32
    %11 = vector.broadcast %cst_5 : f32 to vector<8x1xf32>
    %12 = arith.divf %10, %11 : vector<8x1xf32>
    %13 = math.log %12 : vector<8x1xf32>
    %14 = vector.broadcast %1 : f32 to vector<8x1xf32>
    %15 = arith.mulf %13, %14 : vector<8x1xf32>
    %16 = math.exp %15 : vector<8x1xf32>
    %c0_6 = arith.constant 0 : index
    %c0_7 = arith.constant 0 : index
    %17 = vector.load %arg3[%c0_6, %c0_7] : memref<8x1xf32, #tpu.memory_space<vmem>>, vector<8x1xf32>
    tpu.vector_store %arg3[%c0_6, %c0_7], %16 {strides = array<i32>} : memref<8x1xf32, #tpu.memory_space<vmem>>, vector<8x1xf32>,
    return
  }
  func.func @transform_0(%arg0: i32) -> (i32, i32) {
    %c0_i32 = arith.constant 0 : i32
    %c0_i32_0 = arith.constant 0 : i32
    %c0_i32_1 = arith.constant 0 : i32
    return %c0_i32, %c0_i32_0 : i32, i32
  }
  func.func @transform_1(%arg0: i32) -> (i32, i32) {
    %c0_i32 = arith.constant 0 : i32
    %c0_i32_0 = arith.constant 0 : i32
    return %arg0, %c0_i32 : i32, i32
  }
  func.func @transform_2(%arg0: i32) -> (i32, i32) {
    %c0_i32 = arith.constant 0 : i32
    %c0_i32_0 = arith.constant 0 : i32
    return %arg0, %c0_i32 : i32, i32
  }
}

</mosaic_0001>

<llo_original>
// kernel: tpu_custom_call.1
$region0: #{tpu_custom_call.1}
  #allocation0 [shape = 'u32[]', space=smem, size = 0x4, offset = 0x4, fixed_abs, tag = 'smem constant byte address 0x4 - core index']
  #allocation1 [shape = 'u32[144,128]{1,0:T(1,128)}', space=vmem, size = 0x12000, scoped, tag = 'internal scratch']
  #allocation2 [shape = 'f32[1,1]{1,0:T(1,128)S(6)}', space=smem, size = 0x200, scoped, tag = 'scoped memory for tpu_custom_call.1']
  %s0 = inlined_call_operand.<no memory space> [shape: f32[1,1], index: 0, kind: input, shape index: {}]
  %s1 = inlined_call_operand.hbm [shape: f32[8,256], index: 1, kind: input, shape index: {}]
  %s2 = inlined_call_operand.vmem [shape: f32[8,1], index: 2, kind: output, shape index: {}]
  %s3 = sld [smem:[#allocation0]]
  $region22: #{tpu_custom_call.1} parent=0
    _
  %s5 = ssub.s32 1, %s3
  %s6 = scalar_select 0, %s5, %s3
  %7 = sst [smem:[#allocation2]] %s0
  $region1: #{tpu_custom_call.1} parent=0
    #allocation3 [shape = 'u8[8192]{0}', space=vmem, size = 0x2000, scoped, tag = 'input window, operand 1, single buffered']
    #allocation4 [shape = 's32[1]{0}', space=sflag, size = 0x4, scoped, tag = 'scoped memory for tpu_custom_call.1']
    %8 = vsyncpa [#allocation4], 0
    // Predicated region
    $region2: #{tpu_custom_call.1} parent=1 // pred_check
      _
    $region3: #{tpu_custom_call.1} parent=1 // pred_check_branch
      %10 = sbr.rel (0) target = $region5
    $region4: #{tpu_custom_call.1} parent=1 // pred_region
      _
    $region5: #{tpu_custom_call.1} parent=1 // pred_fallthru
      _
    // Predicated region
    $region6: #{tpu_custom_call.1} parent=1 // pred_check
      _
    $region7: #{tpu_custom_call.1} parent=1 // pred_check_branch
      %12 = sbr.rel (0) target = $region9
    $region8: #{tpu_custom_call.1} parent=1 // pred_region
      %s14 = ssub.s32 256, 256
      %15 = vsyncadd [#allocation4], %s14
      %s17 = sshll.u32 [#allocation3], 4
      %s18 = int_to_ptr.vmem [resolvable:$true] %s17
      %20 = dma.hbm_to_vmem [thread:$0]  %s1, 256, %s18, [#allocation4]
    $region9: #{tpu_custom_call.1} parent=1 // pred_fallthru
      _
    // Predicated region
    $region10: #{tpu_custom_call.1} parent=1 // pred_check
      _
    $region11: #{tpu_custom_call.1} parent=1 // pred_check_branch
      %22 = sbr.rel (0) target = $region13
    $region12: #{tpu_custom_call.1} parent=1 // pred_region
      %23 = dma.done [#allocation4], 256
    $region13: #{tpu_custom_call.1} parent=1 // pred_fallthru
      _
    %s24 = sld [smem:[#allocation2]]
    %v25 = vstv %s24
    %v26 = vrcp.pop %v25
    %s27 = vtos %v26
    %v28 = vld [vmem:[#allocation3] sm:$0xff]
    %v29 = vld [vmem:[#allocation3 + $0x8] sm:$0xff]
    %v30 = vmax.f32 %v28, 1e-06
    %v31 = vmax.f32 %v29, 1e-06
    %v32 = vlog2.pop %v30
    %v33 = vmul.f32 %v32, 0.6931472
    %v34 = vlog2.pop %v31
    %v35 = vmul.f32 %v34, 0.6931472
    %v36 = vstv %s24
    %v37 = vmul.f32 %v36, %v33
    %v38 = vmul.f32 %v36, %v35
    %v39 = vmul.f32 %v37, 1.442695
    %v40 = vpow.pop %v39
    %v41 = vmul.f32 %v38, 1.442695
    %v42 = vpow.pop %v41
    %v43 = vadd.f32 %v40, %v42
    %44 = vadd.xlane.f32.xlu0 %v43
    %v45 = vpop.xlane.xlu0 %44
    %v46 = vrcp.pop 256.0
    %v47 = vmul.f32 %v45, %v46
    %v48 = vlog2.pop %v47
    %v49 = vmul.f32 %v48, 0.6931472
    %v50 = vstv %s27
    %v51 = vmul.f32 %v49, %v50
    %v52 = vmul.f32 %v51, 1.442695
    %v53 = vpow.pop %v52
    %vm54 = vcmask 7168
    %55 = vst.msk [vmem:[%s2] sm:$0xff] %vm54, %v53
    // Predicated region
    $region14: #{tpu_custom_call.1} parent=1 // pred_check
      _
    $region15: #{tpu_custom_call.1} parent=1 // pred_check_branch
      %57 = sbr.rel (0) target = $region17
    $region16: #{tpu_custom_call.1} parent=1 // pred_region
      _
    $region17: #{tpu_custom_call.1} parent=1 // pred_fallthru
      _
    // Predicated region
    $region18: #{tpu_custom_call.1} parent=1 // pred_check
      _
    $region19: #{tpu_custom_call.1} parent=1 // pred_check_branch
      %59 = sbr.rel (0) target = $region21
    $region20: #{tpu_custom_call.1} parent=1 // pred_region
      _
    $region21: #{tpu_custom_call.1} parent=1 // pred_fallthru
      _
    %60 = vsyncpa [#allocation4], 1

</llo_original>
